<compile_context>
chip_gen: v7x
topology: tpu7x:2x2x1
jax: 0.10.0
libtpu: 0.0.40
codegen_flags: <defaults>
</compile_context>

<pallas_src>
import functools

import jax
import jax.numpy as jnp
from jax.experimental import pallas as pl
from jax.experimental.pallas import tpu as pltpu


def _round_up(n, m):
    return ((n + m - 1) // m) * m


def _vmem_limit_bytes():
    # Raise the scoped VMEM limit above the 16/32 MiB defaults, but stay below
    # physical capacity (64 MiB on v7x, 128 MiB on v5e/v6e) with headroom.
    try:
        cap = int(pltpu.get_tpu_info().vmem_capacity_bytes)
    except Exception:
        cap = 64 * 1024 * 1024
    return min(int(cap * 0.85), 100 * 1024 * 1024)


def _bf16_elementwise_default():
    # v6e/v7x VALUs/EUP handle packed bf16; keep the GELU epilogue in f32 on older
    # parts (v5e and earlier have no bf16 VPU/EUP), where it would not help.
    try:
        kind = jax.devices()[0].device_kind.lower()
    except Exception:
        return True
    return not any(old in kind for old in ("v2", "v3", "v4", "v5"))


def _step_vmem_bytes(tm, tf, d):
    """Rough per-grid-step VMEM footprint (double-buffered pipeline blocks + scratch)."""
    row = tm * d * (4 * 2       # x block (f32, double-buffered)
                    + 4 * 2     # out block (f32, double-buffered)
                    + 2         # bf16 LayerNorm cache scratch
                    + 4)        # f32 accumulator scratch
    wgt = 2 * (d * tf * 2) * 2              # W1 + W2 bf16 tiles, double-buffered
    h = tm * tf * 4                         # (tm, tf) GELU intermediate
    small = 2 * (tf * 4 + 3 * d * 4)        # b1 tile, b2/gamma/beta
    return row + wgt + h + small


_TM_CANDIDATES = (1024, 896, 768, 640, 512, 384, 256, 192, 128, 96, 64, 32, 16, 8)


def _pick_tiles(d, f, tile_m, tile_f, budget):
    """Pick (tm_max, tf).  Prefer an untiled d_ff (weights resident, DMA'd exactly
    once per call) whenever it fits alongside a reasonably large row tile; otherwise
    tile d_ff in 128-aligned chunks."""
    tm_floor = min(256, tile_m)
    if f <= tile_f or _step_vmem_bytes(tm_floor, f, d) <= budget:
        tf_opts = (f,)                                      # untiled d_ff
    else:
        tf_opts = tuple(t for t in (min(tile_f, f), 512, 384, 256, 128) if t <= f)
    for tf in tf_opts:
        tf = tf if tf == f else _round_up(tf, 128)
        for tm in _TM_CANDIDATES:
            if tm <= tile_m and _step_vmem_bytes(tm, tf, d) <= budget:
                return tm, tf
    return 8, 128   # last-resort fallback (tiny VMEM budget)


# ---------------------------------------------------------------------------
# kernel
# ---------------------------------------------------------------------------
def _ffn_kernel(x_ref, w1_ref, b1_ref, w2_ref, b2_ref, g_ref, beta_ref,
                o_ref, xn_ref, acc_ref, *, gelu_bf16):
    """grid = (row tiles [parallel], d_ff tiles [arbitrary reduction])."""
    fi = pl.program_id(1)

    # ---- once per row tile: LayerNorm (biased var, eps=1e-5), cached in bf16 ----
    @pl.when(fi == 0)
    def _():
        x = x_ref[...].astype(jnp.float32)
        mean = jnp.mean(x, axis=-1, keepdims=True)
        cent = x - mean
        var = jnp.mean(cent * cent, axis=-1, keepdims=True)
        xn = (cent * jax.lax.rsqrt(var + 1e-5)) * g_ref[...] + beta_ref[...]
        xn_ref[...] = xn.astype(xn_ref.dtype)     # single bf16 cast, reused per d_ff step
        acc_ref[...] = jnp.zeros_like(acc_ref)

    # ---- per d_ff tile: (tm,D)@(D,tf) -> +b1 -> GELU -> accumulate (tm,tf)@(tf,D) ----
    h = jnp.dot(xn_ref[...], w1_ref[...], preferred_element_type=jnp.float32)
    cdt = jnp.bfloat16 if gelu_bf16 else jnp.float32
    h = h.astype(cdt) + b1_ref[...].astype(cdt)
    # tanh-form GELU: transcendental lands in the EUP slot and the VALU op count
    # drops ~3x vs. a rational-erf evaluation.  |tanh-GELU - exact-GELU| ~ 1e-3,
    # below the bf16 MXU-feed error floor (see tolerance note in __main__).
    g = h * 0.5 * (1.0 + jnp.tanh(0.7978845608028654 * (h + 0.044715 * (h * h * h))))
    # TODO(synk): dropout layers are identity at p=0.0 (eval); no RNG emitted.
    acc_ref[...] += jnp.dot(g.astype(jnp.bfloat16), w2_ref[...],
                            preferred_element_type=jnp.float32)

    # ---- once per row tile: bias + residual + store (lane-dense D output) ----
    @pl.when(fi == pl.num_programs(1) - 1)
    def _():
        o_ref[...] = (acc_ref[...] + b2_ref[...]
                      + x_ref[...].astype(jnp.float32)).astype(o_ref.dtype)


# ---------------------------------------------------------------------------
# wrapper
# ---------------------------------------------------------------------------
def prepare_ffn_params(w1, b1, w2, b2, gamma, beta, *, tile_m=1024, tile_f=512):
    """One-time parameter prep: pick d_ff tiling, pad d_ff, cast weights to bf16.
    Hoists the per-call weight cast/pad HBM passes out of the forward path."""
    d, f = w1.shape
    budget = int(_vmem_limit_bytes() * 0.85)   # headroom for compiler-internal scratch
    tm_max, tf = _pick_tiles(d, f, tile_m, tile_f, budget)
    f_pad = _round_up(f, tf)
    if f_pad != f:
        # padded d_ff columns see GELU(0 + 0) = 0 against zero W2 rows -> exact result
        w1 = jnp.pad(w1, ((0, 0), (0, f_pad - f)))
        b1 = jnp.pad(b1, ((0, f_pad - f),))
        w2 = jnp.pad(w2, ((0, f_pad - f), (0, 0)))
    params = dict(
        w1=jnp.asarray(w1, jnp.bfloat16),     # bf16 MXU feed: halves weight HBM traffic
        b1=jnp.asarray(b1, jnp.float32).reshape(1, f_pad),
        w2=jnp.asarray(w2, jnp.bfloat16),
        b2=jnp.asarray(b2, jnp.float32).reshape(1, d),
        gamma=jnp.asarray(gamma, jnp.float32).reshape(1, d),
        beta=jnp.asarray(beta, jnp.float32).reshape(1, d),
    )
    cfg = dict(tf=tf, tm_max=tm_max,
               gelu_bf16=_bf16_elementwise_default(),
               vmem_limit=_vmem_limit_bytes())
    return params, cfg


@functools.partial(jax.jit, static_argnames=("tm", "tf", "gelu_bf16", "vmem_limit"))
def _ffn_apply(x, w1, b1, w2, b2, gamma, beta, *, tm, tf, gelu_bf16, vmem_limit):
    B, S, D = x.shape
    N = B * S
    n_pad = _round_up(N, tm)
    x2 = x.reshape(N, D)
    if n_pad != N:
        # zero-padded rows stay finite through LN/FFN and are sliced off below
        x2 = jnp.pad(x2, ((0, n_pad - N), (0, 0)))
    f_pad = w1.shape[1]
    grid = (n_pad // tm, f_pad // tf)

    out = pl.pallas_call(
        functools.partial(_ffn_kernel, gelu_bf16=gelu_bf16),
        out_shape=jax.ShapeDtypeStruct((n_pad, D), x.dtype),
        grid=grid,
        in_specs=[
            pl.BlockSpec((tm, D), lambda i, fi: (i, 0)),    # x rows (LN input + residual)
            pl.BlockSpec((D, tf), lambda i, fi: (0, fi)),   # W1 tile (bf16); constant index
            pl.BlockSpec((1, tf), lambda i, fi: (0, fi)),   # b1 tile    when d_ff untiled
            pl.BlockSpec((tf, D), lambda i, fi: (fi, 0)),   # W2 tile (bf16)   -> DMA'd once
            pl.BlockSpec((1, D), lambda i, fi: (0, 0)),     # b2
            pl.BlockSpec((1, D), lambda i, fi: (0, 0)),     # gamma
            pl.BlockSpec((1, D), lambda i, fi: (0, 0)),     # beta
        ],
        out_specs=pl.BlockSpec((tm, D), lambda i, fi: (i, 0)),
        scratch_shapes=[
            pltpu.VMEM((tm, D), jnp.bfloat16),   # cached LayerNorm(x), bf16
            pltpu.VMEM((tm, D), jnp.float32),    # second-GEMM f32 accumulator
        ],
        compiler_params=pltpu.CompilerParams(
            dimension_semantics=("parallel", "arbitrary"),
            vmem_limit_bytes=vmem_limit,
        ),
    )(x2, w1, b1, w2, b2, gamma, beta)

    return out[:N].reshape(B, S, D)


def feed_forward_layer(x, params, cfg):
    """x: (B, S, d_model) float32.  params/cfg come from prepare_ffn_params()."""
    N = x.shape[0] * x.shape[1]
    n8 = _round_up(N, 8)
    tm = min(cfg["tm_max"], n8)
    # keep >= 2 row tiles when there are enough rows so the "parallel" axis can
    # shard across both TensorCores on v7x (and megacore parts generally)
    if tm == n8 and n8 >= 16:
        tm = _round_up((n8 + 1) // 2, 8)
    return _ffn_apply(x, params["w1"], params["b1"], params["w2"], params["b2"],
                      params["gamma"], params["beta"],
                      tm=tm, tf=cfg["tf"], gelu_bf16=cfg["gelu_bf16"],
                      vmem_limit=cfg["vmem_limit"])


# ---------------------------------------------------------------------------
# reference + test
# ---------------------------------------------------------------------------
def _reference(x, w1, b1, w2, b2, gamma, beta):
    mean = jnp.mean(x, axis=-1, keepdims=True)
    var = jnp.mean((x - mean) ** 2, axis=-1, keepdims=True)
    xn = (x - mean) / jnp.sqrt(var + 1e-5) * gamma + beta
    h = jax.nn.gelu(xn @ w1 + b1, approximate=False)
    return h @ w2 + b2 + x


if __name__ == "__main__":
    # small, lane-dense shapes consistent with the module: (B, S, d_model), d_ff = 2*d_model
    B, S, D, F = 2, 8, 128, 256

    key = jax.random.PRNGKey(0)
    kx, k1, k2, k3, k4 = jax.random.split(key, 5)

    x = jax.random.normal(kx, (B, S, D), dtype=jnp.float32)
    # deterministic param init (uniform, like nn.Linear's +-1/sqrt(fan_in))
    w1 = jax.random.uniform(k1, (D, F), jnp.float32, -1.0, 1.0) / jnp.sqrt(D)
    b1 = jax.random.uniform(k2, (F,), jnp.float32, -1.0, 1.0) / jnp.sqrt(D)
    w2 = jax.random.uniform(k3, (F, D), jnp.float32, -1.0, 1.0) / jnp.sqrt(F)
    b2 = jax.random.uniform(k4, (D,), jnp.float32, -1.0, 1.0) / jnp.sqrt(F)
    gamma = jnp.ones((D,), jnp.float32)   # nn.LayerNorm init
    beta = jnp.zeros((D,), jnp.float32)

    params, cfg = prepare_ffn_params(w1, b1, w2, b2, gamma, beta)
    out = feed_forward_layer(x, params, cfg)
    out = jax.block_until_ready(out)

    ref = _reference(x, w1, b1, w2, b2, gamma, beta)
    assert out.shape == (B, S, D)
    # Tolerance covers: bf16 MXU feed (weights / LN cache / GELU output), the
    # tanh-form GELU (~1e-3 vs exact erf GELU), and the bf16 elementwise epilogue
    # on v6e/v7x.  Observed error is O(1e-2) on these shapes.
    assert jnp.allclose(out, ref, atol=5e-2, rtol=5e-2), "mismatch vs reference"

    print("KERNEL_OK")
</pallas_src>

<mosaic_0001>
module attributes {stable_mosaic.version = 11 : i64} {
  func.func @_ffn_kernel(%arg0: i32, %arg1: i32, %arg2: memref<8x128xf32, #tpu.memory_space<vmem>>, %arg3: memref<128x256xbf16, #tpu.memory_space<vmem>>, %arg4: memref<1x256xf32, #tpu.memory_space<vmem>>, %arg5: memref<256x128xbf16, #tpu.memory_space<vmem>>, %arg6: memref<1x128xf32, #tpu.memory_space<vmem>>, %arg7: memref<1x128xf32, #tpu.memory_space<vmem>>, %arg8: memref<1x128xf32, #tpu.memory_space<vmem>>, %arg9: memref<8x128xf32, #tpu.memory_space<vmem>>, %arg10: memref<8x128xbf16, #tpu.memory_space<vmem>>, %arg11: memref<8x128xf32, #tpu.memory_space<vmem>>) attributes {dimension_semantics = [#tpu.dimension_semantics<parallel>, #tpu.dimension_semantics<arbitrary>], iteration_bounds = array<i64: 2, 1>, scalar_prefetch = 0 : i64, scratch_operands = 2 : i64, tpu.core_type = #tpu.core_type<tc>, window_params = [{transform_indices = @transform_0, window_bounds = array<i64: 8, 128>}, {transform_indices = @transform_1, window_bounds = array<i64: 128, 256>}, {transform_indices = @transform_2, window_bounds = array<i64: 1, 256>}, {transform_indices = @transform_3, window_bounds = array<i64: 256, 128>}, {pipeline_mode = #tpu.pipeline_mode<synchronous>, transform_indices = @transform_4, window_bounds = array<i64: 1, 128>}, {pipeline_mode = #tpu.pipeline_mode<synchronous>, transform_indices = @transform_5, window_bounds = array<i64: 1, 128>}, {pipeline_mode = #tpu.pipeline_mode<synchronous>, transform_indices = @transform_6, window_bounds = array<i64: 1, 128>}, {transform_indices = @transform_7, window_bounds = array<i64: 8, 128>}]} {
    %c0_i32 = arith.constant 0 : i32
    %0 = arith.cmpi eq, %arg1, %c0_i32 : i32
    %1 = arith.extui %0 : i1 to i32
    %c0_i32_0 = arith.constant 0 : i32
    %2 = arith.cmpi ne, %1, %c0_i32_0 : i32
    scf.if %2 {
      %c0_19 = arith.constant 0 : index
      %c0_20 = arith.constant 0 : index
      %32 = vector.load %arg2[%c0_19, %c0_20] : memref<8x128xf32, #tpu.memory_space<vmem>>, vector<8x128xf32>
      %cst_21 = arith.constant dense<0.000000e+00> : vector<8xf32>
      %33 = vector.multi_reduction <add>, %32, %cst_21 [1] : vector<8x128xf32> to vector<8xf32>
      %34 = vector.shape_cast %33 : vector<8xf32> to vector<8x1xf32>
      %cst_22 = arith.constant 1.280000e+02 : f32
      %35 = vector.broadcast %cst_22 : f32 to vector<8x1xf32>
      %36 = arith.divf %34, %35 : vector<8x1xf32>
      %37 = vector.broadcast %36 : vector<8x1xf32> to vector<8x128xf32>
      %38 = arith.subf %32, %37 : vector<8x128xf32>
      %39 = arith.mulf %38, %38 : vector<8x128xf32>
      %cst_23 = arith.constant dense<0.000000e+00> : vector<8xf32>
      %40 = vector.multi_reduction <add>, %39, %cst_23 [1] : vector<8x128xf32> to vector<8xf32>
      %41 = vector.shape_cast %40 : vector<8xf32> to vector<8x1xf32>
      %cst_24 = arith.constant 1.280000e+02 : f32
      %42 = vector.broadcast %cst_24 : f32 to vector<8x1xf32>
      %43 = arith.divf %41, %42 : vector<8x1xf32>
      %cst_25 = arith.constant 9.99999974E-6 : f32
      %44 = vector.broadcast %cst_25 : f32 to vector<8x1xf32>
      %45 = arith.addf %43, %44 : vector<8x1xf32>
      %46 = math.rsqrt %45 : vector<8x1xf32>
      %47 = vector.broadcast %46 : vector<8x1xf32> to vector<8x128xf32>
      %48 = arith.mulf %38, %47 : vector<8x128xf32>
      %c0_26 = arith.constant 0 : index
      %c0_27 = arith.constant 0 : index
      %49 = vector.load %arg7[%c0_26, %c0_27] : memref<1x128xf32, #tpu.memory_space<vmem>>, vector<1x128xf32>
      %50 = vector.broadcast %49 : vector<1x128xf32> to vector<8x128xf32>
      %51 = arith.mulf %48, %50 : vector<8x128xf32>
      %c0_28 = arith.constant 0 : index
      %c0_29 = arith.constant 0 : index
      %52 = vector.load %arg8[%c0_28, %c0_29] : memref<1x128xf32, #tpu.memory_space<vmem>>, vector<1x128xf32>
      %53 = vector.broadcast %52 : vector<1x128xf32> to vector<8x128xf32>
      %54 = arith.addf %51, %53 : vector<8x128xf32>
      %55 = arith.truncf %54 : vector<8x128xf32> to vector<8x128xbf16>
      %c0_30 = arith.constant 0 : index
      %c0_31 = arith.constant 0 : index
      %56 = vector.load %arg10[%c0_30, %c0_31] : memref<8x128xbf16, #tpu.memory_space<vmem>>, vector<8x128xbf16>
      tpu.vector_store %arg10[%c0_30, %c0_31], %55 {strides = array<i32>} : memref<8x128xbf16, #tpu.memory_space<vmem>>, vector<8x128xbf16>,
      %cst_32 = arith.constant 0.000000e+00 : f32
      %57 = vector.broadcast %cst_32 : f32 to vector<8x128xf32>
      %c0_33 = arith.constant 0 : index
      %c0_34 = arith.constant 0 : index
      %58 = vector.load %arg11[%c0_33, %c0_34] : memref<8x128xf32, #tpu.memory_space<vmem>>, vector<8x128xf32>
      tpu.vector_store %arg11[%c0_33, %c0_34], %57 {strides = array<i32>} : memref<8x128xf32, #tpu.memory_space<vmem>>, vector<8x128xf32>,
    } else {
    }
    %c0 = arith.constant 0 : index
    %c0_1 = arith.constant 0 : index
    %3 = vector.load %arg10[%c0, %c0_1] : memref<8x128xbf16, #tpu.memory_space<vmem>>, vector<8x128xbf16>
    %c0_2 = arith.constant 0 : index
    %c0_3 = arith.constant 0 : index
    %4 = vector.load %arg3[%c0_2, %c0_3] : memref<128x256xbf16, #tpu.memory_space<vmem>>, vector<128x256xbf16>
    %cst = arith.constant dense<0.000000e+00> : vector<8x256xf32>
    %5 = tpu.matmul %3, %4, %cst {dimension_numbers = #tpu.dot_dimension_numbers<[1], [0], [0], [1], [0, 0, 1, 1], [], []>} : vector<8x128xbf16>, vector<128x256xbf16>, vector<8x256xf32> -> vector<8x256xf32>
    %6 = arith.truncf %5 : vector<8x256xf32> to vector<8x256xbf16>
    %c0_4 = arith.constant 0 : index
    %c0_5 = arith.constant 0 : index
    %7 = vector.load %arg4[%c0_4, %c0_5] : memref<1x256xf32, #tpu.memory_space<vmem>>, vector<1x256xf32>
    %8 = arith.truncf %7 : vector<1x256xf32> to vector<1x256xbf16>
    %9 = vector.broadcast %8 : vector<1x256xbf16> to vector<8x256xbf16>
    %10 = arith.addf %6, %9 : vector<8x256xbf16>
    %cst_6 = arith.constant 5.000000e-01 : bf16
    %11 = vector.broadcast %cst_6 : bf16 to vector<8x256xbf16>
    %12 = arith.mulf %10, %11 : vector<8x256xbf16>
    %13 = arith.mulf %10, %10 : vector<8x256xbf16>
    %14 = arith.mulf %13, %10 : vector<8x256xbf16>
    %cst_7 = arith.constant 4.467770e-02 : bf16
    %15 = vector.broadcast %cst_7 : bf16 to vector<8x256xbf16>
    %16 = arith.mulf %15, %14 : vector<8x256xbf16>
    %17 = arith.addf %10, %16 : vector<8x256xbf16>
    %cst_8 = arith.constant 7.968750e-01 : bf16
    %18 = vector.broadcast %cst_8 : bf16 to vector<8x256xbf16>
    %19 = arith.mulf %18, %17 : vector<8x256xbf16>
    %20 = math.tanh %19 : vector<8x256xbf16>
    %cst_9 = arith.constant 1.000000e+00 : bf16
    %21 = vector.broadcast %cst_9 : bf16 to vector<8x256xbf16>
    %22 = arith.addf %21, %20 : vector<8x256xbf16>
    %23 = arith.mulf %12, %22 : vector<8x256xbf16>
    %c0_10 = arith.constant 0 : index
    %c0_11 = arith.constant 0 : index
    %24 = vector.load %arg11[%c0_10, %c0_11] : memref<8x128xf32, #tpu.memory_space<vmem>>, vector<8x128xf32>
    %c0_12 = arith.constant 0 : index
    %c0_13 = arith.constant 0 : index
    %25 = vector.load %arg5[%c0_12, %c0_13] : memref<256x128xbf16, #tpu.memory_space<vmem>>, vector<256x128xbf16>
    %cst_14 = arith.constant dense<0.000000e+00> : vector<8x128xf32>
    %26 = tpu.matmul %23, %25, %cst_14 {dimension_numbers = #tpu.dot_dimension_numbers<[1], [0], [0], [1], [0, 0, 1, 1], [], []>} : vector<8x256xbf16>, vector<256x128xbf16>, vector<8x128xf32> -> vector<8x128xf32>
    %27 = arith.addf %24, %26 : vector<8x128xf32>
    %c0_15 = arith.constant 0 : index
    %c0_16 = arith.constant 0 : index
    %28 = vector.load %arg11[%c0_15, %c0_16] : memref<8x128xf32, #tpu.memory_space<vmem>>, vector<8x128xf32>
    tpu.vector_store %arg11[%c0_15, %c0_16], %27 {strides = array<i32>} : memref<8x128xf32, #tpu.memory_space<vmem>>, vector<8x128xf32>,
    %c0_i32_17 = arith.constant 0 : i32
    %29 = arith.cmpi eq, %arg1, %c0_i32_17 : i32
    %30 = arith.extui %29 : i1 to i32
    %c0_i32_18 = arith.constant 0 : i32
    %31 = arith.cmpi ne, %30, %c0_i32_18 : i32
    scf.if %31 {
      %c0_19 = arith.constant 0 : index
      %c0_20 = arith.constant 0 : index
      %32 = vector.load %arg11[%c0_19, %c0_20] : memref<8x128xf32, #tpu.memory_space<vmem>>, vector<8x128xf32>
      %c0_21 = arith.constant 0 : index
      %c0_22 = arith.constant 0 : index
      %33 = vector.load %arg6[%c0_21, %c0_22] : memref<1x128xf32, #tpu.memory_space<vmem>>, vector<1x128xf32>
      %34 = vector.broadcast %33 : vector<1x128xf32> to vector<8x128xf32>
      %35 = arith.addf %32, %34 : vector<8x128xf32>
      %c0_23 = arith.constant 0 : index
      %c0_24 = arith.constant 0 : index
      %36 = vector.load %arg2[%c0_23, %c0_24] : memref<8x128xf32, #tpu.memory_space<vmem>>, vector<8x128xf32>
      %37 = arith.addf %35, %36 : vector<8x128xf32>
      %c0_25 = arith.constant 0 : index
      %c0_26 = arith.constant 0 : index
      %38 = vector.load %arg9[%c0_25, %c0_26] : memref<8x128xf32, #tpu.memory_space<vmem>>, vector<8x128xf32>
      tpu.vector_store %arg9[%c0_25, %c0_26], %37 {strides = array<i32>} : memref<8x128xf32, #tpu.memory_space<vmem>>, vector<8x128xf32>,
    } else {
    }
    return
  }
  func.func @transform_0(%arg0: i32, %arg1: i32) -> (i32, i32) {
    %c0_i32 = arith.constant 0 : i32
    %c0_i32_0 = arith.constant 0 : i32
    return %arg0, %c0_i32 : i32, i32
  }
  func.func @transform_1(%arg0: i32, %arg1: i32) -> (i32, i32) {
    %c0_i32 = arith.constant 0 : i32
    %c0_i32_0 = arith.constant 0 : i32
    return %c0_i32, %arg1 : i32, i32
  }
  func.func @transform_2(%arg0: i32, %arg1: i32) -> (i32, i32) {
    %c0_i32 = arith.constant 0 : i32
    %c0_i32_0 = arith.constant 0 : i32
    return %c0_i32, %arg1 : i32, i32
  }
  func.func @transform_3(%arg0: i32, %arg1: i32) -> (i32, i32) {
    %c0_i32 = arith.constant 0 : i32
    %c0_i32_0 = arith.constant 0 : i32
    return %arg1, %c0_i32 : i32, i32
  }
  func.func @transform_4(%arg0: i32, %arg1: i32) -> (i32, i32) {
    %c0_i32 = arith.constant 0 : i32
    %c0_i32_0 = arith.constant 0 : i32
    %c0_i32_1 = arith.constant 0 : i32
    return %c0_i32, %c0_i32_0 : i32, i32
  }
  func.func @transform_5(%arg0: i32, %arg1: i32) -> (i32, i32) {
    %c0_i32 = arith.constant 0 : i32
    %c0_i32_0 = arith.constant 0 : i32
    %c0_i32_1 = arith.constant 0 : i32
    return %c0_i32, %c0_i32_0 : i32, i32
  }
  func.func @transform_6(%arg0: i32, %arg1: i32) -> (i32, i32) {
    %c0_i32 = arith.constant 0 : i32
    %c0_i32_0 = arith.constant 0 : i32
    %c0_i32_1 = arith.constant 0 : i32
    return %c0_i32, %c0_i32_0 : i32, i32
  }
  func.func @transform_7(%arg0: i32, %arg1: i32) -> (i32, i32) {
    %c0_i32 = arith.constant 0 : i32
    %c0_i32_0 = arith.constant 0 : i32
    return %arg0, %c0_i32 : i32, i32
  }
}

</mosaic_0001>

<llo_original>
// kernel: _ffn_apply.1
$region0: #{_ffn_apply.1}
  #allocation0 [shape = 'u32[]', space=smem, size = 0x4, offset = 0x4, fixed_abs, tag = 'smem constant byte address 0x4 - core index']
  #allocation1 [shape = 'u32[144,128]{1,0:T(1,128)}', space=vmem, size = 0x12000, scoped, tag = 'internal scratch']
  #allocation2 [shape = 'bf16[8,128]{1,0:T(8,128)(2,1)}', space=vmem, size = 0x800, scoped, tag = 'scratch operand']
  #allocation3 [shape = 'f32[8,128]{1,0:T(8,128)}', space=vmem, size = 0x1000, scoped, tag = 'scratch operand']
  %s0 = inlined_call_operand.hbm [shape: f32[16,128], index: 0, kind: input, shape index: {}]
  %s1 = inlined_call_operand.hbm [shape: bf16[128,256], index: 1, kind: input, shape index: {}]
  %s2 = inlined_call_operand.vmem [shape: f32[1,256], index: 2, kind: input, shape index: {}]
  %s3 = inlined_call_operand.hbm [shape: bf16[256,128], index: 3, kind: input, shape index: {}]
  %s4 = inlined_call_operand.vmem [shape: f32[1,128], index: 4, kind: input, shape index: {}]
  %s5 = inlined_call_operand.vmem [shape: f32[1,128], index: 5, kind: input, shape index: {}]
  %s6 = inlined_call_operand.vmem [shape: f32[1,128], index: 6, kind: input, shape index: {}]
  %s7 = inlined_call_operand.hbm [shape: f32[16,128], index: 7, kind: output, shape index: {}]
  %s8 = sld [smem:[#allocation0]]
  $region81: #{_ffn_apply.1} parent=0
    _
  %s10 = ssub.s32 1, %s8
  %s11 = scalar_select 0, %s10, %s8
  $region1: #{_ffn_apply.1} parent=0
    #allocation4 [shape = 'u8[8192]{0}', space=vmem, size = 0x2000, scoped, tag = 'input window, operand 0']
    #allocation5 [shape = 's32[2]{0}', space=sflag, size = 0x8, scoped, tag = 'scoped memory for _ffn_apply.1']
    #allocation6 [shape = 's32[2]{0}', space=sflag, size = 0x8, scoped, tag = 'scoped memory for _ffn_apply.1']
    #allocation7 [shape = 'u8[65536]{0}', space=vmem, size = 0x10000, scoped, tag = 'input window, operand 1, single buffered']
    #allocation8 [shape = 's32[1]{0}', space=sflag, size = 0x4, scoped, tag = 'scoped memory for _ffn_apply.1']
    #allocation9 [shape = 'u8[65536]{0}', space=vmem, size = 0x10000, scoped, tag = 'input window, operand 3, single buffered']
    #allocation10 [shape = 'u8[8192]{0}', space=vmem, size = 0x2000, scoped, tag = 'output window, operand 0']
    %12 = vsyncpa [#allocation5], 0
    %s13 = scalar_lea.sflag [#allocation5], 1
    %14 = vsyncpa %s13, 0
    %15 = vsyncpa [#allocation8], 0
    %16 = vsyncpa [#allocation6], 0
    %s17 = scalar_lea.sflag [#allocation6], 1
    %18 = vsyncpa %s17, 0
    loop: start=0, step=1, limit=4
    $region2: #{_ffn_apply.1} parent=1 // loop_pre_header
      _
    $region3: #{_ffn_apply.1} parent=1 // loop_header
      %s20 = sphi 0, %s24
      %p21 = scmp.ge.s32.totalorder %s20, 4
      %s27 = sphi 0, %s39
      %s28 = sphi 0, %s35
      %s29 = sphi 0, %s27
      %s30 = sphi 0, %s28
      %s31 = sphi 0, %s29
      %s32 = sphi 0, %s30
      %s42 = sphi 0, %s44
      %s45 = sphi 0, %s42
      %s46 = sphi 0, %s45
      %s62 = sphi 0, %s46
      %s68 = sphi 0, %s70
      %s71 = sphi 0, %s68
      %s72 = sphi 0, %s71
      %s88 = sphi 0, %s72
      %s94 = sphi 0, %s96
      %s97 = sphi 0, %s94
      %s98 = sphi 0, %s97
      %s114 = sphi 0, %s98
      %s120 = sphi 0, %s122
      %s123 = sphi 0, %s120
      %s124 = sphi 0, %s123
      %s140 = sphi 0, %s124
      %s144 = sphi 0, %s144
      %s146 = sphi 0, %s144
      %s147 = sphi 0, %s146
      %s161 = sphi 0, %s147
      %s165 = sphi 0, %s165
      %s167 = sphi 0, %s165
      %s168 = sphi 0, %s167
      %s182 = sphi 0, %s168
      %s186 = sphi 0, %s186
      %s188 = sphi 0, %s186
      %s189 = sphi 0, %s188
      %s203 = sphi 0, %s189
      %s209 = sphi 0, %s211
      %s212 = sphi 0, %s209
      %s213 = sphi 0, %s212
      %s229 = sphi 0, %s213
    $region4: #{_ffn_apply.1} parent=1 // loop_header_branch
      %23 = sbr.rel (%p21) target = $region8
    $region5: #{_ffn_apply.1} parent=1 // loop_body
      %s25 = ssub.s32 %s20, 1
      %s26 = ssub.s32 %s20, 2
      %s33 = sadd.s32 1, %s28
      %p34 = scmp.ge.s32.totalorder %s33, 1
      %s35 = scalar_select %p34, 0, %s33
      %s36 = sadd.s32 1, %s27
      %s37 = scalar_select %p34, %s36, %s27
      %p38 = scmp.ge.s32.totalorder %s37, 2
      %s39 = scalar_select %p38, 0, %s37
      %s40 = ssub.s32 %s27, %s39
      %p41 = scmp.eq.s32.totalorder %s40, 0
      %s43 = sadd.s32 %s42, 1
      %s44 = scalar_select %p41, %s42, %s43
      %p47 = pneg %p41
      %p48 = scmp.eq.s32.totalorder %s20, 1
      %p49 = por %p47, %p48
      %p50 = scmp.ne.s32.totalorder %s42, %s45
      %p51 = scmp.eq.s32.totalorder %s20, 0
      %p52 = por %p50, %p51
      %p53 = scmp.ne.s32.totalorder %s42, %s45
      %p54 = scmp.eq.s32.totalorder %s25, 1
      %p55 = por %p53, %p54
      %p56 = scmp.ne.s32.totalorder %s45, %s46
      %p57 = scmp.eq.s32.totalorder %s25, 0
      %p58 = por %p56, %p57
      %p59 = scmp.ne.s32.totalorder %s45, %s46
      %p60 = scmp.eq.s32.totalorder %s26, 1
      %p61 = por %p59, %p60
      %p63 = scmp.ne.s32.totalorder %s46, %s62
      %p64 = scmp.eq.s32.totalorder %s26, 0
      %p65 = por %p63, %p64
      %s66 = ssub.s32 %s28, %s35
      %p67 = scmp.eq.s32.totalorder %s66, 0
      %s69 = sadd.s32 %s68, 1
      %s70 = scalar_select %p67, %s68, %s69
      %p73 = pneg %p67
      %p74 = scmp.eq.s32.totalorder %s20, 1
      %p75 = por %p73, %p74
      %p76 = scmp.ne.s32.totalorder %s68, %s71
      %p77 = scmp.eq.s32.totalorder %s20, 0
      %p78 = por %p76, %p77
      %p79 = scmp.ne.s32.totalorder %s68, %s71
      %p80 = scmp.eq.s32.totalorder %s25, 1
      %p81 = por %p79, %p80
      %p82 = scmp.ne.s32.totalorder %s71, %s72
      %p83 = scmp.eq.s32.totalorder %s25, 0
      %p84 = por %p82, %p83
      %p85 = scmp.ne.s32.totalorder %s71, %s72
      %p86 = scmp.eq.s32.totalorder %s26, 1
      %p87 = por %p85, %p86
      %p89 = scmp.ne.s32.totalorder %s72, %s88
      %p90 = scmp.eq.s32.totalorder %s26, 0
      %p91 = por %p89, %p90
      %s92 = ssub.s32 %s28, %s35
      %p93 = scmp.eq.s32.totalorder %s92, 0
      %s95 = sadd.s32 %s94, 1
      %s96 = scalar_select %p93, %s94, %s95
      %p99 = pneg %p93
      %p100 = scmp.eq.s32.totalorder %s20, 1
      %p101 = por %p99, %p100
      %p102 = scmp.ne.s32.totalorder %s94, %s97
      %p103 = scmp.eq.s32.totalorder %s20, 0
      %p104 = por %p102, %p103
      %p105 = scmp.ne.s32.totalorder %s94, %s97
      %p106 = scmp.eq.s32.totalorder %s25, 1
      %p107 = por %p105, %p106
      %p108 = scmp.ne.s32.totalorder %s97, %s98
      %p109 = scmp.eq.s32.totalorder %s25, 0
      %p110 = por %p108, %p109
      %p111 = scmp.ne.s32.totalorder %s97, %s98
      %p112 = scmp.eq.s32.totalorder %s26, 1
      %p113 = por %p111, %p112
      %p115 = scmp.ne.s32.totalorder %s98, %s114
      %p116 = scmp.eq.s32.totalorder %s26, 0
      %p117 = por %p115, %p116
      %s118 = ssub.s32 %s28, %s35
      %p119 = scmp.eq.s32.totalorder %s118, 0
      %s121 = sadd.s32 %s120, 1
      %s122 = scalar_select %p119, %s120, %s121
      %p125 = pneg %p119
      %p126 = scmp.eq.s32.totalorder %s20, 1
      %p127 = por %p125, %p126
      %p128 = scmp.ne.s32.totalorder %s120, %s123
      %p129 = scmp.eq.s32.totalorder %s20, 0
      %p130 = por %p128, %p129
      %p131 = scmp.ne.s32.totalorder %s120, %s123
      %p132 = scmp.eq.s32.totalorder %s25, 1
      %p133 = por %p131, %p132
      %p134 = scmp.ne.s32.totalorder %s123, %s124
      %p135 = scmp.eq.s32.totalorder %s25, 0
      %p136 = por %p134, %p135
      %p137 = scmp.ne.s32.totalorder %s123, %s124
      %p138 = scmp.eq.s32.totalorder %s26, 1
      %p139 = por %p137, %p138
      %p141 = scmp.ne.s32.totalorder %s124, %s140
      %p142 = scmp.eq.s32.totalorder %s26, 0
      %p143 = por %p141, %p142
      %s145 = sadd.s32 %s144, 1
      %p148 = scmp.eq.s32.totalorder %s20, 1
      %p149 = scmp.ne.s32.totalorder %s144, %s146
      %p150 = scmp.eq.s32.totalorder %s20, 0
      %p151 = por %p149, %p150
      %p152 = scmp.ne.s32.totalorder %s144, %s146
      %p153 = scmp.eq.s32.totalorder %s25, 1
      %p154 = por %p152, %p153
      %p155 = scmp.ne.s32.totalorder %s146, %s147
      %p156 = scmp.eq.s32.totalorder %s25, 0
      %p157 = por %p155, %p156
      %p158 = scmp.ne.s32.totalorder %s146, %s147
      %p159 = scmp.eq.s32.totalorder %s26, 1
      %p160 = por %p158, %p159
      %p162 = scmp.ne.s32.totalorder %s147, %s161
      %p163 = scmp.eq.s32.totalorder %s26, 0
      %p164 = por %p162, %p163
      %s166 = sadd.s32 %s165, 1
      %p169 = scmp.eq.s32.totalorder %s20, 1
      %p170 = scmp.ne.s32.totalorder %s165, %s167
      %p171 = scmp.eq.s32.totalorder %s20, 0
      %p172 = por %p170, %p171
      %p173 = scmp.ne.s32.totalorder %s165, %s167
      %p174 = scmp.eq.s32.totalorder %s25, 1
      %p175 = por %p173, %p174
      %p176 = scmp.ne.s32.totalorder %s167, %s168
      %p177 = scmp.eq.s32.totalorder %s25, 0
      %p178 = por %p176, %p177
      %p179 = scmp.ne.s32.totalorder %s167, %s168
      %p180 = scmp.eq.s32.totalorder %s26, 1
      %p181 = por %p179, %p180
      %p183 = scmp.ne.s32.totalorder %s168, %s182
      %p184 = scmp.eq.s32.totalorder %s26, 0
      %p185 = por %p183, %p184
      %s187 = sadd.s32 %s186, 1
      %p190 = scmp.eq.s32.totalorder %s20, 1
      %p191 = scmp.ne.s32.totalorder %s186, %s188
      %p192 = scmp.eq.s32.totalorder %s20, 0
      %p193 = por %p191, %p192
      %p194 = scmp.ne.s32.totalorder %s186, %s188
      %p195 = scmp.eq.s32.totalorder %s25, 1
      %p196 = por %p194, %p195
      %p197 = scmp.ne.s32.totalorder %s188, %s189
      %p198 = scmp.eq.s32.totalorder %s25, 0
      %p199 = por %p197, %p198
      %p200 = scmp.ne.s32.totalorder %s188, %s189
      %p201 = scmp.eq.s32.totalorder %s26, 1
      %p202 = por %p200, %p201
      %p204 = scmp.ne.s32.totalorder %s189, %s203
      %p205 = scmp.eq.s32.totalorder %s26, 0
      %p206 = por %p204, %p205
      %s207 = ssub.s32 %s27, %s39
      %p208 = scmp.eq.s32.totalorder %s207, 0
      %s210 = sadd.s32 %s209, 1
      %s211 = scalar_select %p208, %s209, %s210
      %p214 = pneg %p208
      %p215 = scmp.eq.s32.totalorder %s20, 1
      %p216 = por %p214, %p215
      %p217 = scmp.ne.s32.totalorder %s209, %s212
      %p218 = scmp.eq.s32.totalorder %s20, 0
      %p219 = por %p217, %p218
      %p220 = scmp.ne.s32.totalorder %s209, %s212
      %p221 = scmp.eq.s32.totalorder %s25, 1
      %p222 = por %p220, %p221
      %p223 = scmp.ne.s32.totalorder %s212, %s213
      %p224 = scmp.eq.s32.totalorder %s25, 0
      %p225 = por %p223, %p224
      %p226 = scmp.ne.s32.totalorder %s212, %s213
      %p227 = scmp.eq.s32.totalorder %s26, 1
      %p228 = por %p226, %p227
      %p230 = scmp.ne.s32.totalorder %s213, %s229
      %p231 = scmp.eq.s32.totalorder %s26, 0
      %p232 = por %p230, %p231
      %p233 = scmp.le.s32.totalorder 1, %s20
      %p234 = scmp.lt.s32.totalorder %s20, 3
      %p235 = pnand %p233, %p234
      %p236 = pneg %p235
      // Predicated region
      $region9: #{_ffn_apply.1} parent=5 // pred_check
        _
      $region10: #{_ffn_apply.1} parent=5 // pred_check_branch
        %238 = sbr.rel (%p235) target = $region12
      $region11: #{_ffn_apply.1} parent=5 // pred_region
        %s239 = ssub.s32 %s20, 1
        // Predicated region
        $region13: #{_ffn_apply.1} parent=11 // pred_check
          %p240 = pneg %p84
        $region14: #{_ffn_apply.1} parent=11 // pred_check_branch
          %242 = sbr.rel (%p240) target = $region16
        $region15: #{_ffn_apply.1} parent=11 // pred_region
          %s243 = smul.u32 2, %s30
          %s245 = ssub.s32 2048, 2048
          %246 = vsyncadd [#allocation8], %s245
          %s247 = smul.addr %s243, 64
          %s248 = scalar_lea.hbm %s1, %s247
          %s249 = sshll.u32 [#allocation7], 4
          %s250 = int_to_ptr.vmem [resolvable:$true] %s249
          %255 = dma.hbm_to_vmem [thread:$0]  %s248, 2048, %s250, [#allocation8], 128, 128, 8
        $region16: #{_ffn_apply.1} parent=11 // pred_fallthru
          _
        // Predicated region
        $region17: #{_ffn_apply.1} parent=11 // pred_check
          %p256 = pneg %p110
        $region18: #{_ffn_apply.1} parent=11 // pred_check_branch
          %258 = sbr.rel (%p256) target = $region20
        $region19: #{_ffn_apply.1} parent=11 // pred_region
          %s259 = smul.u32 2, %s30
          %p260 = scmp.lt.s32.totalorder %s259, 1
          %s261 = scalar_select %p260, %s259, 1
          %s262 = scalar_lea.vmem %s2, %s261
          %s263 = smul.u32 2, %s30
        $region20: #{_ffn_apply.1} parent=11 // pred_fallthru
          _
        // Predicated region
        $region21: #{_ffn_apply.1} parent=11 // pred_check
          %p264 = pneg %p136
        $region22: #{_ffn_apply.1} parent=11 // pred_check_branch
          %266 = sbr.rel (%p264) target = $region24
        $region23: #{_ffn_apply.1} parent=11 // pred_region
          %s267 = smul.u32 32, %s30
          %s269 = ssub.s32 2048, 2048
          %270 = vsyncadd [#allocation8], %s269
          %s271 = smul.addr %s267, 64
          %s272 = scalar_lea.hbm %s3, %s271
          %s273 = sshll.u32 [#allocation9], 4
          %s274 = int_to_ptr.vmem [resolvable:$true] %s273
          %279 = dma.hbm_to_vmem [thread:$0]  %s272, 2048, %s274, [#allocation8], 64, 64, 4
        $region24: #{_ffn_apply.1} parent=11 // pred_fallthru
          _
        // Predicated region
        $region25: #{_ffn_apply.1} parent=11 // pred_check
          %p280 = pneg %p157
        $region26: #{_ffn_apply.1} parent=11 // pred_check_branch
          %282 = sbr.rel (%p280) target = $region28
        $region27: #{_ffn_apply.1} parent=11 // pred_region
          _
        $region28: #{_ffn_apply.1} parent=11 // pred_fallthru
          _
        // Predicated region
        $region29: #{_ffn_apply.1} parent=11 // pred_check
          %p283 = pneg %p178
        $region30: #{_ffn_apply.1} parent=11 // pred_check_branch
          %285 = sbr.rel (%p283) target = $region32
        $region31: #{_ffn_apply.1} parent=11 // pred_region
          _
        $region32: #{_ffn_apply.1} parent=11 // pred_fallthru
          _
        // Predicated region
        $region33: #{_ffn_apply.1} parent=11 // pred_check
          %p286 = pneg %p199
        $region34: #{_ffn_apply.1} parent=11 // pred_check_branch
          %288 = sbr.rel (%p286) target = $region36
        $region35: #{_ffn_apply.1} parent=11 // pred_region
          _
        $region36: #{_ffn_apply.1} parent=11 // pred_fallthru
          _
      $region12: #{_ffn_apply.1} parent=5 // pred_fallthru
        _
      %p289 = scmp.lt.s32.totalorder %s20, 2
      // Predicated region
      $region37: #{_ffn_apply.1} parent=5 // pred_check
        %p290 = pneg %p289
      $region38: #{_ffn_apply.1} parent=5 // pred_check_branch
        %292 = sbr.rel (%p290) target = $region40
      $region39: #{_ffn_apply.1} parent=5 // pred_region
        // Predicated region
        $region41: #{_ffn_apply.1} parent=39 // pred_check
          %p293 = pneg %p52
        $region42: #{_ffn_apply.1} parent=39 // pred_check_branch
          %295 = sbr.rel (%p293) target = $region44
        $region43: #{_ffn_apply.1} parent=39 // pred_region
          %s296 = sand.u32 %s42, 1
          %s297 = scalar_lea.sflag [#allocation5], %s296
          %s298 = sand.u32 %s42, 1
          %s299 = smul.addr %s298, 8
          %s300 = scalar_lea.vmem [#allocation4], %s299
          %s302 = ssub.s32 128, 128
          %303 = vsyncadd %s297, %s302
          %s304 = smul.addr %s27, 128
          %s305 = scalar_lea.hbm %s0, %s304
          %s307 = sshll.u32 %s300, 4
          %s308 = int_to_ptr.vmem [resolvable:$true] %s307
          %310 = dma.hbm_to_vmem [thread:$0]  %s305, 128, %s308, %s297
        $region44: #{_ffn_apply.1} parent=39 // pred_fallthru
          _
      $region40: #{_ffn_apply.1} parent=5 // pred_fallthru
        _
      %p311 = scmp.le.s32.totalorder 1, %s20
      %p312 = scmp.lt.s32.totalorder %s20, 3
      %p313 = pnand %p311, %p312
      %p314 = pneg %p313
      // Predicated region
      $region45: #{_ffn_apply.1} parent=5 // pred_check
        _
      $region46: #{_ffn_apply.1} parent=5 // pred_check_branch
        %316 = sbr.rel (%p313) target = $region48
      $region47: #{_ffn_apply.1} parent=5 // pred_region
        %s317 = ssub.s32 %s20, 1
        %s318 = sand.u32 %s45, 1
        %s319 = scalar_lea.sflag [#allocation5], %s318
        %s320 = sand.u32 %s45, 1
        %s321 = smul.addr %s320, 8
        %s322 = scalar_lea.vmem [#allocation4], %s321
        // Predicated region
        $region49: #{_ffn_apply.1} parent=47 // pred_check
          %p323 = pneg %p58
        $region50: #{_ffn_apply.1} parent=47 // pred_check_branch
          %325 = sbr.rel (%p323) target = $region52
        $region51: #{_ffn_apply.1} parent=47 // pred_region
          %326 = dma.done %s319, 128
        $region52: #{_ffn_apply.1} parent=47 // pred_fallthru
          _
        // Predicated region
        $region53: #{_ffn_apply.1} parent=47 // pred_check
          %p327 = pneg %p84
        $region54: #{_ffn_apply.1} parent=47 // pred_check_branch
          %329 = sbr.rel (%p327) target = $region56
        $region55: #{_ffn_apply.1} parent=47 // pred_region
          %330 = dma.done [#allocation8], 2048
        $region56: #{_ffn_apply.1} parent=47 // pred_fallthru
          _
        // Predicated region
        $region57: #{_ffn_apply.1} parent=47 // pred_check
          %p331 = pneg %p136
        $region58: #{_ffn_apply.1} parent=47 // pred_check_branch
          %333 = sbr.rel (%p331) target = $region60
        $region59: #{_ffn_apply.1} parent=47 // pred_region
          %334 = dma.done [#allocation8], 2048
        $region60: #{_ffn_apply.1} parent=47 // pred_fallthru
          _
        %s335 = sand.u32 %s45, 1
        %s336 = scalar_lea.sflag [#allocation5], %s335
        %s337 = sand.u32 %s45, 1
        %s338 = smul.addr %s337, 8
        %s339 = scalar_lea.vmem [#allocation4], %s338
        %p340 = pneg %p58
        %p341 = pneg %p55
        %p342 = pneg %p84
        %p343 = pneg %p81
        %s344 = smul.u32 2, %s30
        %p345 = scmp.lt.s32.totalorder %s344, 1
        %s346 = scalar_select %p345, %s344, 1
        %s347 = scalar_lea.vmem %s2, %s346
        %p348 = pneg %p110
        %p349 = pneg %p107
        %p350 = pneg %p136
        %p351 = pneg %p133
        %p352 = pneg %p157
        %p353 = pneg %p154
        %p354 = pneg %p178
        %p355 = pneg %p175
        %p356 = pneg %p199
        %p357 = pneg %p196
        %p358 = pneg %p225
        %p359 = pneg %p222
        %s360 = sand.u32 %s212, 1
        %s361 = scalar_lea.sflag [#allocation6], %s360
        %s362 = sand.u32 %s212, 1
        %s363 = smul.addr %s362, 8
        %s364 = scalar_lea.vmem [#allocation10], %s363
        %s365 = smul.u32 2, %s30
        %s366 = smul.u32 2, %s30
        %p367 = scmp.lt.s32.totalorder %s366, 1
        %s368 = scalar_select %p367, %s366, 1
        %s369 = scalar_lea.vmem %s2, %s368
        %s370 = smul.u32 2, %s30
        %s371 = smul.u32 32, %s30
        %p377 = scmp.eq.s32.totalorder %s30, 0
        // Predicated region
        $region61: #{_ffn_apply.1} parent=47 // pred_check
          %p378 = pneg %p377
        $region62: #{_ffn_apply.1} parent=47 // pred_check_branch
          %380 = sbr.rel (%p378) target = $region64
        $region63: #{_ffn_apply.1} parent=47 // pred_region
          %v381 = vld [vmem:[%s322] sm:$0xff]
          %382 = vadd.xlane.f32.xlu0 %v381
          %v383 = vpop.xlane.xlu0 %382
          %v384 = vrcp.pop 128.0
          %v385 = vmul.f32 %v383, %v384
          %v386 = vsub.f32 %v381, %v385
          %v387 = vmul.f32 %v386, %v386
          %388 = vadd.xlane.f32.xlu0 %v387
          %v389 = vpop.xlane.xlu0 %388
          %v390 = vmul.f32 %v389, %v384
          %v391 = vadd.f32 %v390, 1e-05
          %v392 = vrsqrt.pop %v391
          %v393 = vmul.f32 %v386, %v392
          %v394 = vld [vmem:[%s5] sm:$0x1]
          %v396 = vlaneseq
          %v397 = vshrl.u32 %v396, 7
          %v398 = vsub.s32 0, %v397
          %v399 = vrot.slane %v394, %v398
          %v401 = vmul.f32 %v393, %v399
          %v402 = vld [vmem:[%s6] sm:$0x1]
          %v404 = vlaneseq
          %v405 = vshrl.u32 %v404, 7
          %v406 = vsub.s32 0, %v405
          %v407 = vrot.slane %v402, %v406
          %v409 = vadd.f32 %v401, %v407
          %v410 = vpack.c.bf16 %v409, %v409
          %411 = vst [vmem:[#allocation2] sm:$0xf] %v410
          %412 = vst [vmem:[#allocation3] sm:$0xff] 0.0
        $region64: #{_ffn_apply.1} parent=47 // pred_fallthru
          _
        %v413 = vld [vmem:[#allocation2] sm:$0xf]
        %v414 = vld [vmem:[#allocation7] sm:$0xff]
        %v415 = vld [vmem:[#allocation7 + $0x8] sm:$0xff]
        %v416 = vld [vmem:[#allocation7 + $0x10] sm:$0xff]
        %v417 = vld [vmem:[#allocation7 + $0x18] sm:$0xff]
        %v418 = vld [vmem:[#allocation7 + $0x20] sm:$0xff]
        %v419 = vld [vmem:[#allocation7 + $0x28] sm:$0xff]
        %v420 = vld [vmem:[#allocation7 + $0x30] sm:$0xff]
        %v421 = vld [vmem:[#allocation7 + $0x38] sm:$0xff]
        %v422 = vld [vmem:[#allocation7 + $0x40] sm:$0xff]
        %v423 = vld [vmem:[#allocation7 + $0x48] sm:$0xff]
        %v424 = vld [vmem:[#allocation7 + $0x50] sm:$0xff]
        %v425 = vld [vmem:[#allocation7 + $0x58] sm:$0xff]
        %v426 = vld [vmem:[#allocation7 + $0x60] sm:$0xff]
        %v427 = vld [vmem:[#allocation7 + $0x68] sm:$0xff]
        %v428 = vld [vmem:[#allocation7 + $0x70] sm:$0xff]
        %v429 = vld [vmem:[#allocation7 + $0x78] sm:$0xff]
        %v446 = vunpack.c.l.b16 %v414
        %v447 = vunpack.c.h.b16 %v414
        %v448 = vunpack.c.l.b16 %v415
        %v449 = vunpack.c.h.b16 %v415
        %v450 = vunpack.c.l.b16 %v416
        %v451 = vunpack.c.h.b16 %v416
        %v452 = vunpack.c.l.b16 %v417
        %v453 = vunpack.c.h.b16 %v417
        %v454 = vunpack.c.l.b16 %v418
        %v455 = vunpack.c.h.b16 %v418
        %v456 = vunpack.c.l.b16 %v419
        %v457 = vunpack.c.h.b16 %v419
        %v458 = vunpack.c.l.b16 %v420
        %v459 = vunpack.c.h.b16 %v420
        %v460 = vunpack.c.l.b16 %v421
        %v461 = vunpack.c.h.b16 %v421
        %v462 = vunpack.c.l.b16 %v422
        %v463 = vunpack.c.h.b16 %v422
        %v464 = vunpack.c.l.b16 %v423
        %v465 = vunpack.c.h.b16 %v423
        %v466 = vunpack.c.l.b16 %v424
        %v467 = vunpack.c.h.b16 %v424
        %v468 = vunpack.c.l.b16 %v425
        %v469 = vunpack.c.h.b16 %v425
        %v470 = vunpack.c.l.b16 %v426
        %v471 = vunpack.c.h.b16 %v426
        %v472 = vunpack.c.l.b16 %v427
        %v473 = vunpack.c.h.b16 %v427
        %v474 = vunpack.c.l.b16 %v428
        %v475 = vunpack.c.h.b16 %v428
        %v476 = vunpack.c.l.b16 %v429
        %v477 = vunpack.c.h.b16 %v429
        %v478 = vpack.c.b16 %v448, %v446
        %v479 = vpack.c.b16 %v449, %v447
        %v480 = vpack.c.b16 %v452, %v450
        %v481 = vpack.c.b16 %v453, %v451
        %v482 = vpack.c.b16 %v456, %v454
        %v483 = vpack.c.b16 %v457, %v455
        %v484 = vpack.c.b16 %v460, %v458
        %v485 = vpack.c.b16 %v461, %v459
        %v486 = vpack.c.b16 %v464, %v462
        %v487 = vpack.c.b16 %v465, %v463
        %v488 = vpack.c.b16 %v468, %v466
        %v489 = vpack.c.b16 %v469, %v467
        %v490 = vpack.c.b16 %v472, %v470
        %v491 = vpack.c.b16 %v473, %v471
        %v492 = vpack.c.b16 %v476, %v474
        %v493 = vpack.c.b16 %v477, %v475
        %510 = vmatprep.subr.bf16.mxu0 %v479
        %511 = vmatpush1.bf16.msra.mxu0 %v478
        %512 = vmatprep.subr.bf16.mxu0 %v481
        %513 = vmatpush1.bf16.msra.mxu0 %v480
        %514 = vmatprep.subr.bf16.mxu0 %v483
        %515 = vmatpush1.bf16.msra.mxu0 %v482
        %516 = vmatprep.subr.bf16.mxu0 %v485
        %517 = vmatpush1.bf16.msra.mxu0 %v484
        %518 = vmatprep.subr.bf16.mxu0 %v487
        %519 = vmatpush1.bf16.msra.mxu0 %v486
        %520 = vmatprep.subr.bf16.mxu0 %v489
        %521 = vmatpush1.bf16.msra.mxu0 %v488
        %522 = vmatprep.subr.bf16.mxu0 %v491
        %523 = vmatpush1.bf16.msra.mxu0 %v490
        %524 = vmatprep.subr.bf16.mxu0 %v493
        %525 = vmatpush1.bf16.msra.mxu0 %v492
        %526 = vmatprep.subr.bf16.mxu0 0
        %527 = vmatpush1.bf16.msra.mxu0 0
        %528 = vmatprep.subr.bf16.mxu0 0
        %529 = vmatpush1.bf16.msra.mxu0 0
        %530 = vmatprep.subr.bf16.mxu0 0
        %531 = vmatpush1.bf16.msra.mxu0 0
        %532 = vmatprep.subr.bf16.mxu0 0
        %533 = vmatpush1.bf16.msra.mxu0 0
        %534 = vmatprep.subr.bf16.mxu0 0
        %535 = vmatpush1.bf16.msra.mxu0 0
        %536 = vmatprep.subr.bf16.mxu0 0
        %537 = vmatpush1.bf16.msra.mxu0 0
        %538 = vmatprep.subr.bf16.mxu0 0
        %539 = vmatpush1.bf16.msra.mxu0 0
        %540 = vmatprep.subr.bf16.mxu0 0
        %541 = vmatpush1.bf16.msra.mxu0 0
        %542 = vmatprep.mubr.bf16.mxu0 0
        %543 = vmatmul.mubr.bf16.gmra.mrb[0].mxu0 %v413
        %v544 = vpop.f32.mrb[0].mxu0
        %v545 = vadd.f32 0.0, %v544
        %v546 = vpop.f32.mrb[0].mxu0
        %v547 = vadd.f32 0.0, %v546
        %v548 = vpop.f32.mrb[0].mxu0
        %v549 = vpop.f32.mrb[0].mxu0
        %550 = vdwg.mxu0
        %v551 = vpack.c.bf16 %v545, %v545
        %v552 = vpack.c.bf16 %v547, %v547
        %v553 = vld [vmem:[%s369] sm:$0x3]
        %v555 = vlaneseq
        %v556 = vshrl.u32 %v555, 7
        %v557 = vsub.s32 0, %v556
        %v558 = vrot.slane %v553, %v557
        %v559 = vlaneseq
        %v560 = vshrl.u32 %v559, 7
        %v561 = vsub.s32 1, %v560
        %v562 = vrot.slane %v553, %v561
        %v565 = vpack.c.bf16 %v558, %v558
        %v566 = vpack.c.bf16 %v562, %v562
        %v568 = vpack.i.b16 %v565, %v565
        %v570 = vlaneseq
        %v571 = vshrl.u32 %v570, 7
        %v572 = vsub.s32 0, %v571
        %v573 = vrot.slane %v568, %v572
        %v575 = vpack.i.b16 %v566, %v566
        %v577 = vlaneseq
        %v578 = vshrl.u32 %v577, 7
        %v579 = vsub.s32 0, %v578
        %v580 = vrot.slane %v575, %v579
        %v581 = vadd.bf16 %v551, %v573
        %v582 = vadd.bf16 %v552, %v580
        %v583 = vmul.bf16 %v581, 1056980736
        %v584 = vmul.bf16 %v582, 1056980736
        %v585 = vmul.bf16 %v581, %v581
        %v586 = vmul.bf16 %v582, %v582
        %v587 = vmul.bf16 %v585, %v581
        %v588 = vmul.bf16 %v586, %v582
        %v589 = vmul.bf16 %v587, 1027030327
        %v590 = vmul.bf16 %v588, 1027030327
        %v591 = vadd.bf16 %v581, %v589
        %v592 = vadd.bf16 %v582, %v590
        %v593 = vmul.bf16 %v591, 1061961548
        %v594 = vmul.bf16 %v592, 1061961548
        %v595 = vtanh.bf16.pop %v593
        %v596 = vtanh.bf16.pop %v594
        %v597 = vadd.bf16 %v595, 1065369472
        %v598 = vadd.bf16 %v596, 1065369472
        %v599 = vmul.bf16 %v583, %v597
        %v600 = vmul.bf16 %v584, %v598
        %v601 = vld [vmem:[#allocation3] sm:$0xff]
        %v602 = vld [vmem:[#allocation9] sm:$0xf]
        %v603 = vld [vmem:[#allocation9 + $0x4] sm:$0xf]
        %v604 = vld [vmem:[#allocation9 + $0x8] sm:$0xf]
        %v605 = vld [vmem:[#allocation9 + $0xc] sm:$0xf]
        %v606 = vld [vmem:[#allocation9 + $0x10] sm:$0xf]
        %v607 = vld [vmem:[#allocation9 + $0x14] sm:$0xf]
        %v608 = vld [vmem:[#allocation9 + $0x18] sm:$0xf]
        %v609 = vld [vmem:[#allocation9 + $0x1c] sm:$0xf]
        %v610 = vld [vmem:[#allocation9 + $0x20] sm:$0xf]
        %v611 = vld [vmem:[#allocation9 + $0x24] sm:$0xf]
        %v612 = vld [vmem:[#allocation9 + $0x28] sm:$0xf]
        %v613 = vld [vmem:[#allocation9 + $0x2c] sm:$0xf]
        %v614 = vld [vmem:[#allocation9 + $0x30] sm:$0xf]
        %v615 = vld [vmem:[#allocation9 + $0x34] sm:$0xf]
        %v616 = vld [vmem:[#allocation9 + $0x38] sm:$0xf]
        %v617 = vld [vmem:[#allocation9 + $0x3c] sm:$0xf]
        %v618 = vld [vmem:[#allocation9 + $0x40] sm:$0xf]
        %v619 = vld [vmem:[#allocation9 + $0x44] sm:$0xf]
        %v620 = vld [vmem:[#allocation9 + $0x48] sm:$0xf]
        %v621 = vld [vmem:[#allocation9 + $0x4c] sm:$0xf]
        %v622 = vld [vmem:[#allocation9 + $0x50] sm:$0xf]
        %v623 = vld [vmem:[#allocation9 + $0x54] sm:$0xf]
        %v624 = vld [vmem:[#allocation9 + $0x58] sm:$0xf]
        %v625 = vld [vmem:[#allocation9 + $0x5c] sm:$0xf]
        %v626 = vld [vmem:[#allocation9 + $0x60] sm:$0xf]
        %v627 = vld [vmem:[#allocation9 + $0x64] sm:$0xf]
        %v628 = vld [vmem:[#allocation9 + $0x68] sm:$0xf]
        %v629 = vld [vmem:[#allocation9 + $0x6c] sm:$0xf]
        %v630 = vld [vmem:[#allocation9 + $0x70] sm:$0xf]
        %v631 = vld [vmem:[#allocation9 + $0x74] sm:$0xf]
        %v632 = vld [vmem:[#allocation9 + $0x78] sm:$0xf]
        %v633 = vld [vmem:[#allocation9 + $0x7c] sm:$0xf]
        %v666 = vunpack.c.l.b16 %v602
        %v667 = vunpack.c.l.b16 %v603
        %v668 = vunpack.c.l.b16 %v604
        %v669 = vunpack.c.l.b16 %v605
        %v670 = vunpack.c.l.b16 %v606
        %v671 = vunpack.c.l.b16 %v607
        %v672 = vunpack.c.l.b16 %v608
        %v673 = vunpack.c.l.b16 %v609
        %v674 = vunpack.c.l.b16 %v610
        %v675 = vunpack.c.l.b16 %v611
        %v676 = vunpack.c.l.b16 %v612
        %v677 = vunpack.c.l.b16 %v613
        %v678 = vunpack.c.l.b16 %v614
        %v679 = vunpack.c.l.b16 %v615
        %v680 = vunpack.c.l.b16 %v616
        %v681 = vunpack.c.l.b16 %v617
        %v682 = vunpack.c.l.b16 %v618
        %v683 = vunpack.c.l.b16 %v619
        %v684 = vunpack.c.l.b16 %v620
        %v685 = vunpack.c.l.b16 %v621
        %v686 = vunpack.c.l.b16 %v622
        %v687 = vunpack.c.l.b16 %v623
        %v688 = vunpack.c.l.b16 %v624
        %v689 = vunpack.c.l.b16 %v625
        %v690 = vunpack.c.l.b16 %v626
        %v691 = vunpack.c.l.b16 %v627
        %v692 = vunpack.c.l.b16 %v628
        %v693 = vunpack.c.l.b16 %v629
        %v694 = vunpack.c.l.b16 %v630
        %v695 = vunpack.c.l.b16 %v631
        %v696 = vunpack.c.l.b16 %v632
        %v697 = vunpack.c.l.b16 %v633
        %v698 = vpack.c.b16 %v667, %v666
        %v699 = vpack.c.b16 %v669, %v668
        %v700 = vpack.c.b16 %v671, %v670
        %v701 = vpack.c.b16 %v673, %v672
        %v702 = vpack.c.b16 %v675, %v674
        %v703 = vpack.c.b16 %v677, %v676
        %v704 = vpack.c.b16 %v679, %v678
        %v705 = vpack.c.b16 %v681, %v680
        %v706 = vpack.c.b16 %v683, %v682
        %v707 = vpack.c.b16 %v685, %v684
        %v708 = vpack.c.b16 %v687, %v686
        %v709 = vpack.c.b16 %v689, %v688
        %v710 = vpack.c.b16 %v691, %v690
        %v711 = vpack.c.b16 %v693, %v692
        %v712 = vpack.c.b16 %v695, %v694
        %v713 = vpack.c.b16 %v697, %v696
        %730 = vmatprep.subr.bf16.mxu0 0
        %731 = vmatpush1.bf16.msra.mxu0 %v698
        %732 = vmatprep.subr.bf16.mxu0 0
        %733 = vmatpush1.bf16.msra.mxu0 %v699
        %734 = vmatprep.subr.bf16.mxu0 0
        %735 = vmatpush1.bf16.msra.mxu0 %v700
        %736 = vmatprep.subr.bf16.mxu0 0
        %737 = vmatpush1.bf16.msra.mxu0 %v701
        %738 = vmatprep.subr.bf16.mxu0 0
        %739 = vmatpush1.bf16.msra.mxu0 %v702
        %740 = vmatprep.subr.bf16.mxu0 0
        %741 = vmatpush1.bf16.msra.mxu0 %v703
        %742 = vmatprep.subr.bf16.mxu0 0
        %743 = vmatpush1.bf16.msra.mxu0 %v704
        %744 = vmatprep.subr.bf16.mxu0 0
        %745 = vmatpush1.bf16.msra.mxu0 %v705
        %746 = vmatprep.subr.bf16.mxu0 0
        %747 = vmatpush1.bf16.msra.mxu0 %v706
        %748 = vmatprep.subr.bf16.mxu0 0
        %749 = vmatpush1.bf16.msra.mxu0 %v707
        %750 = vmatprep.subr.bf16.mxu0 0
        %751 = vmatpush1.bf16.msra.mxu0 %v708
        %752 = vmatprep.subr.bf16.mxu0 0
        %753 = vmatpush1.bf16.msra.mxu0 %v709
        %754 = vmatprep.subr.bf16.mxu0 0
        %755 = vmatpush1.bf16.msra.mxu0 %v710
        %756 = vmatprep.subr.bf16.mxu0 0
        %757 = vmatpush1.bf16.msra.mxu0 %v711
        %758 = vmatprep.subr.bf16.mxu0 0
        %759 = vmatpush1.bf16.msra.mxu0 %v712
        %760 = vmatprep.subr.bf16.mxu0 0
        %761 = vmatpush1.bf16.msra.mxu0 %v713
        %762 = vmatprep.mubr.bf16.mxu0 %v600
        %763 = vmatmul.mubr.bf16.gmra.mrb[0].mxu0 %v599
        %v764 = vpop.f32.mrb[0].mxu0
        %v765 = vadd.f32 0.0, %v764
        %v766 = vpop.f32.mrb[0].mxu0
        %v767 = vpop.f32.mrb[0].mxu0
        %v768 = vpop.f32.mrb[0].mxu0
        %769 = vdwg.mxu0
        %v770 = vadd.f32 %v601, %v765
        %771 = vst [vmem:[#allocation3] sm:$0xff] %v770
        // Predicated region
        $region65: #{_ffn_apply.1} parent=47 // pred_check
          %p772 = pneg %p377
        $region66: #{_ffn_apply.1} parent=47 // pred_check_branch
          %774 = sbr.rel (%p772) target = $region68
        $region67: #{_ffn_apply.1} parent=47 // pred_region
          %v775 = vld [vmem:[#allocation3] sm:$0xff]
          %v776 = vld [vmem:[%s4] sm:$0x1]
          %v778 = vlaneseq
          %v779 = vshrl.u32 %v778, 7
          %v780 = vsub.s32 0, %v779
          %v781 = vrot.slane %v776, %v780
          %v783 = vadd.f32 %v775, %v781
          %v784 = vld [vmem:[%s322] sm:$0xff]
          %v785 = vadd.f32 %v783, %v784
          %786 = vst [vmem:[%s364] sm:$0xff] %v785
        $region68: #{_ffn_apply.1} parent=47 // pred_fallthru
          _
        %s787 = sand.u32 %s212, 1
        %s788 = scalar_lea.sflag [#allocation6], %s787
        %s789 = sand.u32 %s212, 1
        %s790 = smul.addr %s789, 8
        %s791 = scalar_lea.vmem [#allocation10], %s790
        // Predicated region
        $region69: #{_ffn_apply.1} parent=47 // pred_check
          %p792 = pneg %p222
        $region70: #{_ffn_apply.1} parent=47 // pred_check_branch
          %794 = sbr.rel (%p792) target = $region72
        $region71: #{_ffn_apply.1} parent=47 // pred_region
          %s796 = ssub.s32 128, 128
          %797 = vsyncadd %s788, %s796
          %s798 = smul.addr %s29, 128
          %s799 = scalar_lea.hbm %s7, %s798
          %s801 = sshll.u32 %s791, 4
          %s802 = int_to_ptr.vmem [resolvable:$true] %s801
          %804 = dma.vmem_to_hbm [thread:$0]  %s802, 128, %s799, %s788
        $region72: #{_ffn_apply.1} parent=47 // pred_fallthru
          _
      $region48: #{_ffn_apply.1} parent=5 // pred_fallthru
        _
      %p805 = scmp.le.s32.totalorder 2, %s20
      // Predicated region
      $region73: #{_ffn_apply.1} parent=5 // pred_check
        %p806 = pneg %p805
      $region74: #{_ffn_apply.1} parent=5 // pred_check_branch
        %808 = sbr.rel (%p806) target = $region76
      $region75: #{_ffn_apply.1} parent=5 // pred_region
        %s809 = ssub.s32 %s20, 2
        // Predicated region
        $region77: #{_ffn_apply.1} parent=75 // pred_check
          %p810 = pneg %p228
        $region78: #{_ffn_apply.1} parent=75 // pred_check_branch
          %812 = sbr.rel (%p810) target = $region80
        $region79: #{_ffn_apply.1} parent=75 // pred_region
          %s813 = sand.u32 %s213, 1
          %s814 = scalar_lea.sflag [#allocation6], %s813
          %s815 = sand.u32 %s213, 1
          %s816 = smul.addr %s815, 8
          %s817 = scalar_lea.vmem [#allocation10], %s816
          %818 = dma.done %s814, 128
        $region80: #{_ffn_apply.1} parent=75 // pred_fallthru
          _
      $region76: #{_ffn_apply.1} parent=5 // pred_fallthru
        _
    $region6: #{_ffn_apply.1} parent=1 // loop_footer
      %s24 = sadd.s32 1, %s20
    $region7: #{_ffn_apply.1} parent=1 // loop_footer_branch
      %19 = sbr.rel target = $region3
    $region8: #{_ffn_apply.1} parent=1 // loop_exit
      _
    %819 = vsyncpa [#allocation5], 1
    %s820 = scalar_lea.sflag [#allocation5], 1
    %821 = vsyncpa %s820, 1
    %822 = vsyncpa [#allocation8], 1
    %823 = vsyncpa [#allocation6], 1
    %s824 = scalar_lea.sflag [#allocation6], 1
    %825 = vsyncpa %s824, 1

</llo_original>
